<compile_context>
chip_gen: v7x
topology: tpu7x:2x2x1
jax: 0.10.0
libtpu: 0.0.40
codegen_flags: <defaults>
</compile_context>

<pallas_src>
import functools

import jax
import jax.numpy as jnp
from jax.experimental import pallas as pl
from jax.experimental.pallas import tpu as pltpu


def _round_up(x, m):
    return ((x + m - 1) // m) * m


def se_block_kernel(x_ref, w1_ref, b1_ref, w2_ref, b2_ref, o_ref, acc_ref, *, inv_hw):
    # x_ref:   (block_n, block_hw, C)  input dtype (f32/bf16) - one spatial tile
    # w1_ref:  (C, C//r) f32           (transposed from torch's (out, in))
    # b1_ref:  (1, C//r) f32
    # w2_ref:  (C//r, C) f32
    # b2_ref:  (1, C)    f32
    # o_ref:   (block_n, C) f32        output gate (written on the last spatial step)
    # acc_ref: (block_n, C) f32        running spatial sum (VMEM scratch)
    k = pl.program_id(1)

    @pl.when(k == 0)
    def _():
        acc_ref[...] = jnp.zeros_like(acc_ref)

    # Spatial reduction over the sublane axis (axis=1); C stays on the lane axis,
    # so this is plain VPU adds across vregs (no cross-lane XLU reduce).
    x = x_ref[...].astype(jnp.float32)
    acc_ref[...] += jnp.sum(x, axis=1)                                    # (block_n, C)

    @pl.when(k == pl.num_programs(1) - 1)
    def _():
        pooled = acc_ref[...] * inv_hw                                    # AdaptiveAvgPool2d((1,1))
        h = jnp.dot(pooled, w1_ref[...],
                    preferred_element_type=jnp.float32) + b1_ref[...]     # (block_n, C//r)
        h = jnp.maximum(h, 0.0)                                           # ReLU
        y = jnp.dot(h, w2_ref[...],
                    preferred_element_type=jnp.float32) + b2_ref[...]     # (block_n, C)
        o_ref[...] = jax.nn.sigmoid(y).astype(o_ref.dtype)                # Sigmoid


def se_block_forward(x_nchw, w1, b1, w2, b2, *, block_n=None, block_hw=None):
    """x_nchw: (N, C, H, W).  w1: (C//r, C) torch layout, b1: (C//r,), w2: (C, C//r), b2: (C,)."""
    N, C, H, W = x_nchw.shape
    Ch = w1.shape[0]
    HW = H * W
    x_dtype = x_nchw.dtype
    itemsize = jnp.dtype(x_dtype).itemsize

    # (N, HW, C): spatial on the sublane axis, channels lane-dense.
    # Keep the input dtype (no f32 upcast in the wrapper).
    x = jnp.transpose(x_nchw.reshape(N, C, HW), (0, 2, 1))

    if block_n is None:
        block_n = N if N <= 8 else 8
    if block_hw is None:
        # Target ~2 MiB per x tile (the pipeline double-buffers it): fits v5e's 16 MiB
        # default scoped VMEM and v7x's 64 MiB physical with headroom, while staying
        # >= 512 along the streamed dim to amortize per-step overhead.
        target = max(512, (2 * 1024 * 1024) // max(1, block_n * C * itemsize))
        target = max(8, (target // 8) * 8)
        block_hw = min(_round_up(HW, 8), target)

    N_pad = _round_up(N, block_n)
    HW_pad = _round_up(HW, block_hw)
    if (N_pad, HW_pad) != (N, HW):
        # Zero padding is safe: padded rows add zero to the spatial sum, padded batch
        # rows are sliced off below.
        x = jnp.pad(x, ((0, N_pad - N), (0, HW_pad - HW), (0, 0)))

    w1_t = jnp.asarray(w1, jnp.float32).T                    # (C, C//r)
    w2_t = jnp.asarray(w2, jnp.float32).T                    # (C//r, C)
    b1_2d = jnp.asarray(b1, jnp.float32).reshape(1, Ch)
    b2_2d = jnp.asarray(b2, jnp.float32).reshape(1, C)

    grid = (N_pad // block_n, HW_pad // block_hw)

    grid_spec = pltpu.PrefetchScalarGridSpec(
        num_scalar_prefetch=0,
        grid=grid,
        in_specs=[
            pl.BlockSpec((block_n, block_hw, C), lambda i, k: (i, k, 0)),
            # Weights/biases: constant index_map -> resident across the reduction axis.
            pl.BlockSpec((C, Ch), lambda i, k: (0, 0)),
            pl.BlockSpec((1, Ch), lambda i, k: (0, 0)),
            pl.BlockSpec((Ch, C), lambda i, k: (0, 0)),
            pl.BlockSpec((1, C), lambda i, k: (0, 0)),
        ],
        out_specs=pl.BlockSpec((block_n, C), lambda i, k: (i, 0)),
        scratch_shapes=[pltpu.VMEM((block_n, C), jnp.float32)],
    )

    cost = pl.CostEstimate(
        flops=int(N * HW * C + 2 * 2 * N * C * Ch),           # pooling adds + two tiny matmuls
        transcendentals=int(N * C),                            # sigmoid
        bytes_accessed=int(N_pad * HW_pad * C * itemsize
                           + (2 * C * Ch + Ch + C) * 4
                           + N_pad * C * 4),
    )

    out = pl.pallas_call(
        functools.partial(se_block_kernel, inv_hw=1.0 / float(HW)),
        out_shape=jax.ShapeDtypeStruct((N_pad, C), jnp.float32),
        grid_spec=grid_spec,
        compiler_params=pltpu.CompilerParams(
            # Batch axis shards across TensorCores (v7x megacore); spatial reduction
            # axis stays sequential.
            dimension_semantics=("parallel", "arbitrary"),
            vmem_limit_bytes=32 * 1024 * 1024,
        ),
        cost_estimate=cost,
    )(x, w1_t, b1_2d, w2_t, b2_2d)

    return out[:N].reshape(N, C, 1, 1)


def se_block_reference(x_nchw, w1, b1, w2, b2):
    pooled = jnp.mean(x_nchw.astype(jnp.float32), axis=(2, 3))            # (N, C)
    h = jnp.maximum(pooled @ w1.T + b1, 0.0)
    y = jax.nn.sigmoid(h @ w2.T + b2)
    return y.reshape(x_nchw.shape[0], x_nchw.shape[1], 1, 1)


if __name__ == "__main__":
    # Small shapes consistent with the module: batch=2, channels=16, spatial=16x16, r=4.
    N, C, H, W = 2, 16, 16, 16
    r = 4
    Ch = C // r

    key = jax.random.PRNGKey(0)
    kx, kw1, kb1, kw2, kb2 = jax.random.split(key, 5)

    x = jax.random.normal(kx, (N, C, H, W), dtype=jnp.float32)
    # Deterministic synthetic parameters (torch nn.Linear layouts: weight is (out, in)).
    w1 = jax.random.normal(kw1, (Ch, C), dtype=jnp.float32) * 0.1
    b1 = jax.random.normal(kb1, (Ch,), dtype=jnp.float32) * 0.1
    w2 = jax.random.normal(kw2, (C, Ch), dtype=jnp.float32) * 0.1
    b2 = jax.random.normal(kb2, (C,), dtype=jnp.float32) * 0.1

    out = se_block_forward(x, w1, b1, w2, b2)
    jax.block_until_ready(out)

    ref = se_block_reference(x, w1, b1, w2, b2)
    assert out.shape == (N, C, 1, 1)
    assert jnp.allclose(out, ref, atol=1e-5, rtol=1e-5), "mismatch vs reference"

    print("KERNEL_OK")
</pallas_src>

<mosaic_0001>
module attributes {stable_mosaic.version = 11 : i64} {
  func.func @se_block_kernel(%arg0: i32, %arg1: i32, %arg2: memref<2x256x16xf32, #tpu.memory_space<vmem>>, %arg3: memref<16x4xf32, #tpu.memory_space<vmem>>, %arg4: memref<1x4xf32, #tpu.memory_space<vmem>>, %arg5: memref<4x16xf32, #tpu.memory_space<vmem>>, %arg6: memref<1x16xf32, #tpu.memory_space<vmem>>, %arg7: memref<2x16xf32, #tpu.memory_space<vmem>>, %arg8: memref<2x16xf32, #tpu.memory_space<vmem>>) attributes {dimension_semantics = [#tpu.dimension_semantics<parallel>, #tpu.dimension_semantics<arbitrary>], iteration_bounds = array<i64: 1, 1>, scalar_prefetch = 0 : i64, scratch_operands = 1 : i64, tpu.core_type = #tpu.core_type<tc>, window_params = [{transform_indices = @transform_0, window_bounds = array<i64: 2, 256, 16>}, {pipeline_mode = #tpu.pipeline_mode<synchronous>, transform_indices = @transform_1, window_bounds = array<i64: 16, 4>}, {pipeline_mode = #tpu.pipeline_mode<synchronous>, transform_indices = @transform_2, window_bounds = array<i64: 1, 4>}, {pipeline_mode = #tpu.pipeline_mode<synchronous>, transform_indices = @transform_3, window_bounds = array<i64: 4, 16>}, {pipeline_mode = #tpu.pipeline_mode<synchronous>, transform_indices = @transform_4, window_bounds = array<i64: 1, 16>}, {transform_indices = @transform_5, window_bounds = array<i64: 2, 16>}]} {
    %c0_i32 = arith.constant 0 : i32
    %0 = arith.cmpi eq, %arg1, %c0_i32 : i32
    %1 = arith.extui %0 : i1 to i32
    %c0_i32_0 = arith.constant 0 : i32
    %2 = arith.cmpi ne, %1, %c0_i32_0 : i32
    scf.if %2 {
      %cst_9 = arith.constant 0.000000e+00 : f32
      %11 = vector.broadcast %cst_9 : f32 to vector<2x16xf32>
      %c0_10 = arith.constant 0 : index
      %c0_11 = arith.constant 0 : index
      %12 = vector.load %arg8[%c0_10, %c0_11] : memref<2x16xf32, #tpu.memory_space<vmem>>, vector<2x16xf32>
      tpu.vector_store %arg8[%c0_10, %c0_11], %11 {strides = array<i32>} : memref<2x16xf32, #tpu.memory_space<vmem>>, vector<2x16xf32>,
    } else {
    }
    %c0 = arith.constant 0 : index
    %c0_1 = arith.constant 0 : index
    %c0_2 = arith.constant 0 : index
    %3 = vector.load %arg2[%c0, %c0_1, %c0_2] : memref<2x256x16xf32, #tpu.memory_space<vmem>>, vector<2x256x16xf32>
    %c0_3 = arith.constant 0 : index
    %c0_4 = arith.constant 0 : index
    %4 = vector.load %arg8[%c0_3, %c0_4] : memref<2x16xf32, #tpu.memory_space<vmem>>, vector<2x16xf32>
    %cst = arith.constant dense<0.000000e+00> : vector<2x16xf32>
    %5 = vector.multi_reduction <add>, %3, %cst [1] : vector<2x256x16xf32> to vector<2x16xf32>
    %6 = arith.addf %4, %5 : vector<2x16xf32>
    %c0_5 = arith.constant 0 : index
    %c0_6 = arith.constant 0 : index
    %7 = vector.load %arg8[%c0_5, %c0_6] : memref<2x16xf32, #tpu.memory_space<vmem>>, vector<2x16xf32>
    tpu.vector_store %arg8[%c0_5, %c0_6], %6 {strides = array<i32>} : memref<2x16xf32, #tpu.memory_space<vmem>>, vector<2x16xf32>,
    %c0_i32_7 = arith.constant 0 : i32
    %8 = arith.cmpi eq, %arg1, %c0_i32_7 : i32
    %9 = arith.extui %8 : i1 to i32
    %c0_i32_8 = arith.constant 0 : i32
    %10 = arith.cmpi ne, %9, %c0_i32_8 : i32
    scf.if %10 {
      %c0_9 = arith.constant 0 : index
      %c0_10 = arith.constant 0 : index
      %11 = vector.load %arg8[%c0_9, %c0_10] : memref<2x16xf32, #tpu.memory_space<vmem>>, vector<2x16xf32>
      %cst_11 = arith.constant 3.906250e-03 : f32
      %12 = vector.broadcast %cst_11 : f32 to vector<2x16xf32>
      %13 = arith.mulf %11, %12 : vector<2x16xf32>
      %c0_12 = arith.constant 0 : index
      %c0_13 = arith.constant 0 : index
      %14 = vector.load %arg3[%c0_12, %c0_13] : memref<16x4xf32, #tpu.memory_space<vmem>>, vector<16x4xf32>
      %cst_14 = arith.constant dense<0.000000e+00> : vector<2x4xf32>
      %15 = tpu.matmul %13, %14, %cst_14 {dimension_numbers = #tpu.dot_dimension_numbers<[1], [0], [0], [1], [0, 0, 1, 1], [], []>} : vector<2x16xf32>, vector<16x4xf32>, vector<2x4xf32> -> vector<2x4xf32>
      %c0_15 = arith.constant 0 : index
      %c0_16 = arith.constant 0 : index
      %16 = vector.load %arg4[%c0_15, %c0_16] : memref<1x4xf32, #tpu.memory_space<vmem>>, vector<1x4xf32>
      %17 = vector.broadcast %16 : vector<1x4xf32> to vector<2x4xf32>
      %18 = arith.addf %15, %17 : vector<2x4xf32>
      %cst_17 = arith.constant 0.000000e+00 : f32
      %19 = vector.broadcast %cst_17 : f32 to vector<2x4xf32>
      %20 = arith.maximumf %18, %19 : vector<2x4xf32>
      %c0_18 = arith.constant 0 : index
      %c0_19 = arith.constant 0 : index
      %21 = vector.load %arg5[%c0_18, %c0_19] : memref<4x16xf32, #tpu.memory_space<vmem>>, vector<4x16xf32>
      %cst_20 = arith.constant dense<0.000000e+00> : vector<2x16xf32>
      %22 = tpu.matmul %20, %21, %cst_20 {dimension_numbers = #tpu.dot_dimension_numbers<[1], [0], [0], [1], [0, 0, 1, 1], [], []>} : vector<2x4xf32>, vector<4x16xf32>, vector<2x16xf32> -> vector<2x16xf32>
      %c0_21 = arith.constant 0 : index
      %c0_22 = arith.constant 0 : index
      %23 = vector.load %arg6[%c0_21, %c0_22] : memref<1x16xf32, #tpu.memory_space<vmem>>, vector<1x16xf32>
      %24 = vector.broadcast %23 : vector<1x16xf32> to vector<2x16xf32>
      %25 = arith.addf %22, %24 : vector<2x16xf32>
      %26 = arith.negf %25 : vector<2x16xf32>
      %27 = math.exp %26 : vector<2x16xf32>
      %cst_23 = arith.constant 1.000000e+00 : f32
      %28 = vector.broadcast %cst_23 : f32 to vector<2x16xf32>
      %29 = arith.addf %28, %27 : vector<2x16xf32>
      %30 = arith.divf %28, %29 : vector<2x16xf32>
      %c0_24 = arith.constant 0 : index
      %c0_25 = arith.constant 0 : index
      %31 = vector.load %arg7[%c0_24, %c0_25] : memref<2x16xf32, #tpu.memory_space<vmem>>, vector<2x16xf32>
      tpu.vector_store %arg7[%c0_24, %c0_25], %30 {strides = array<i32>} : memref<2x16xf32, #tpu.memory_space<vmem>>, vector<2x16xf32>,
    } else {
    }
    return
  }
  func.func @transform_0(%arg0: i32, %arg1: i32) -> (i32, i32, i32) {
    %c0_i32 = arith.constant 0 : i32
    %c0_i32_0 = arith.constant 0 : i32
    return %arg0, %arg1, %c0_i32 : i32, i32, i32
  }
  func.func @transform_1(%arg0: i32, %arg1: i32) -> (i32, i32) {
    %c0_i32 = arith.constant 0 : i32
    %c0_i32_0 = arith.constant 0 : i32
    %c0_i32_1 = arith.constant 0 : i32
    return %c0_i32, %c0_i32_0 : i32, i32
  }
  func.func @transform_2(%arg0: i32, %arg1: i32) -> (i32, i32) {
    %c0_i32 = arith.constant 0 : i32
    %c0_i32_0 = arith.constant 0 : i32
    %c0_i32_1 = arith.constant 0 : i32
    return %c0_i32, %c0_i32_0 : i32, i32
  }
  func.func @transform_3(%arg0: i32, %arg1: i32) -> (i32, i32) {
    %c0_i32 = arith.constant 0 : i32
    %c0_i32_0 = arith.constant 0 : i32
    %c0_i32_1 = arith.constant 0 : i32
    return %c0_i32, %c0_i32_0 : i32, i32
  }
  func.func @transform_4(%arg0: i32, %arg1: i32) -> (i32, i32) {
    %c0_i32 = arith.constant 0 : i32
    %c0_i32_0 = arith.constant 0 : i32
    %c0_i32_1 = arith.constant 0 : i32
    return %c0_i32, %c0_i32_0 : i32, i32
  }
  func.func @transform_5(%arg0: i32, %arg1: i32) -> (i32, i32) {
    %c0_i32 = arith.constant 0 : i32
    %c0_i32_0 = arith.constant 0 : i32
    return %arg0, %c0_i32 : i32, i32
  }
}

</mosaic_0001>

<llo_original>
// kernel: tpu_custom_call.1
$region0: #{tpu_custom_call.1}
  #allocation0 [shape = 'u32[]', space=smem, size = 0x4, offset = 0x4, fixed_abs, tag = 'smem constant byte address 0x4 - core index']
  #allocation1 [shape = 'u32[144,128]{1,0:T(1,128)}', space=vmem, size = 0x12000, scoped, tag = 'internal scratch']
  #allocation2 [shape = 'f32[2,16]{1,0:T(2,128)}', space=vmem, size = 0x400, scoped, tag = 'scratch operand']
  %s0 = inlined_call_operand.vmem [shape: f32[2,256,16], index: 0, kind: input, shape index: {}]
  %s1 = inlined_call_operand.vmem [shape: f32[16,4], index: 1, kind: input, shape index: {}]
  %s2 = inlined_call_operand.vmem [shape: f32[1,4], index: 2, kind: input, shape index: {}]
  %s3 = inlined_call_operand.vmem [shape: f32[4,16], index: 3, kind: input, shape index: {}]
  %s4 = inlined_call_operand.vmem [shape: f32[1,16], index: 4, kind: input, shape index: {}]
  %s5 = inlined_call_operand.hbm [shape: f32[2,16], index: 5, kind: output, shape index: {}]
  %s6 = sld [smem:[#allocation0]]
  $region38: #{tpu_custom_call.1} parent=0
    _
  %s8 = ssub.s32 1, %s6
  %s9 = scalar_select 0, %s8, %s6
  $region1: #{tpu_custom_call.1} parent=0
    #allocation3 [shape = 'u8[1024]{0}', space=vmem, size = 0x400, scoped, tag = 'output window, operand 0, single buffered']
    #allocation4 [shape = 's32[1]{0}', space=sflag, size = 0x4, scoped, tag = 'scoped memory for tpu_custom_call.1']
    %10 = vsyncpa [#allocation4], 0
    // Predicated region
    $region2: #{tpu_custom_call.1} parent=1 // pred_check
      _
    $region3: #{tpu_custom_call.1} parent=1 // pred_check_branch
      %12 = sbr.rel (0) target = $region5
    $region4: #{tpu_custom_call.1} parent=1 // pred_region
      _
    $region5: #{tpu_custom_call.1} parent=1 // pred_fallthru
      _
    // Predicated region
    $region6: #{tpu_custom_call.1} parent=1 // pred_check
      _
    $region7: #{tpu_custom_call.1} parent=1 // pred_check_branch
      %14 = sbr.rel (0) target = $region9
    $region8: #{tpu_custom_call.1} parent=1 // pred_region
      _
    $region9: #{tpu_custom_call.1} parent=1 // pred_fallthru
      _
    // Predicated region
    $region10: #{tpu_custom_call.1} parent=1 // pred_check
      _
    $region11: #{tpu_custom_call.1} parent=1 // pred_check_branch
      %16 = sbr.rel (0) target = $region13
    $region12: #{tpu_custom_call.1} parent=1 // pred_region
      _
    $region13: #{tpu_custom_call.1} parent=1 // pred_fallthru
      _
    // Predicated region
    $region14: #{tpu_custom_call.1} parent=1 // pred_check
      _
    $region15: #{tpu_custom_call.1} parent=1 // pred_check_branch
      %18 = sbr.rel (0) target = $region17
    $region16: #{tpu_custom_call.1} parent=1 // pred_region
      _
    $region17: #{tpu_custom_call.1} parent=1 // pred_fallthru
      _
    // Predicated region
    $region18: #{tpu_custom_call.1} parent=1 // pred_check
      _
    $region19: #{tpu_custom_call.1} parent=1 // pred_check_branch
      %20 = sbr.rel (0) target = $region21
    $region20: #{tpu_custom_call.1} parent=1 // pred_region
      _
    $region21: #{tpu_custom_call.1} parent=1 // pred_fallthru
      _
    %p21 = scmp.eq.s32.totalorder 0, 0
    // Predicated region
    $region22: #{tpu_custom_call.1} parent=1 // pred_check
      %p22 = pneg %p21
    $region23: #{tpu_custom_call.1} parent=1 // pred_check_branch
      %24 = sbr.rel (%p22) target = $region25
    $region24: #{tpu_custom_call.1} parent=1 // pred_region
      %vm25 = vcmask 123904
      %26 = vst.msk [vmem:[#allocation2] sm:$0x3] %vm25, 0.0
    $region25: #{tpu_custom_call.1} parent=1 // pred_fallthru
      _
    %v27 = vld [vmem:[%s0] sm:$0xff]
    %v28 = vld [vmem:[%s0 + $0x8] sm:$0xff]
    %v29 = vld [vmem:[%s0 + $0x10] sm:$0xff]
    %v30 = vld [vmem:[%s0 + $0x18] sm:$0xff]
    %v31 = vld [vmem:[%s0 + $0x20] sm:$0xff]
    %v32 = vld [vmem:[%s0 + $0x28] sm:$0xff]
    %v33 = vld [vmem:[%s0 + $0x30] sm:$0xff]
    %v34 = vld [vmem:[%s0 + $0x38] sm:$0xff]
    %v35 = vld [vmem:[%s0 + $0x40] sm:$0xff]
    %v36 = vld [vmem:[%s0 + $0x48] sm:$0xff]
    %v37 = vld [vmem:[%s0 + $0x50] sm:$0xff]
    %v38 = vld [vmem:[%s0 + $0x58] sm:$0xff]
    %v39 = vld [vmem:[%s0 + $0x60] sm:$0xff]
    %v40 = vld [vmem:[%s0 + $0x68] sm:$0xff]
    %v41 = vld [vmem:[%s0 + $0x70] sm:$0xff]
    %v42 = vld [vmem:[%s0 + $0x78] sm:$0xff]
    %v43 = vld [vmem:[%s0 + $0x80] sm:$0xff]
    %v44 = vld [vmem:[%s0 + $0x88] sm:$0xff]
    %v45 = vld [vmem:[%s0 + $0x90] sm:$0xff]
    %v46 = vld [vmem:[%s0 + $0x98] sm:$0xff]
    %v47 = vld [vmem:[%s0 + $0xa0] sm:$0xff]
    %v48 = vld [vmem:[%s0 + $0xa8] sm:$0xff]
    %v49 = vld [vmem:[%s0 + $0xb0] sm:$0xff]
    %v50 = vld [vmem:[%s0 + $0xb8] sm:$0xff]
    %v51 = vld [vmem:[%s0 + $0xc0] sm:$0xff]
    %v52 = vld [vmem:[%s0 + $0xc8] sm:$0xff]
    %v53 = vld [vmem:[%s0 + $0xd0] sm:$0xff]
    %v54 = vld [vmem:[%s0 + $0xd8] sm:$0xff]
    %v55 = vld [vmem:[%s0 + $0xe0] sm:$0xff]
    %v56 = vld [vmem:[%s0 + $0xe8] sm:$0xff]
    %v57 = vld [vmem:[%s0 + $0xf0] sm:$0xff]
    %v58 = vld [vmem:[%s0 + $0xf8] sm:$0xff]
    %v59 = vld [vmem:[%s0 + $0x100] sm:$0xff]
    %v60 = vld [vmem:[%s0 + $0x108] sm:$0xff]
    %v61 = vld [vmem:[%s0 + $0x110] sm:$0xff]
    %v62 = vld [vmem:[%s0 + $0x118] sm:$0xff]
    %v63 = vld [vmem:[%s0 + $0x120] sm:$0xff]
    %v64 = vld [vmem:[%s0 + $0x128] sm:$0xff]
    %v65 = vld [vmem:[%s0 + $0x130] sm:$0xff]
    %v66 = vld [vmem:[%s0 + $0x138] sm:$0xff]
    %v67 = vld [vmem:[%s0 + $0x140] sm:$0xff]
    %v68 = vld [vmem:[%s0 + $0x148] sm:$0xff]
    %v69 = vld [vmem:[%s0 + $0x150] sm:$0xff]
    %v70 = vld [vmem:[%s0 + $0x158] sm:$0xff]
    %v71 = vld [vmem:[%s0 + $0x160] sm:$0xff]
    %v72 = vld [vmem:[%s0 + $0x168] sm:$0xff]
    %v73 = vld [vmem:[%s0 + $0x170] sm:$0xff]
    %v74 = vld [vmem:[%s0 + $0x178] sm:$0xff]
    %v75 = vld [vmem:[%s0 + $0x180] sm:$0xff]
    %v76 = vld [vmem:[%s0 + $0x188] sm:$0xff]
    %v77 = vld [vmem:[%s0 + $0x190] sm:$0xff]
    %v78 = vld [vmem:[%s0 + $0x198] sm:$0xff]
    %v79 = vld [vmem:[%s0 + $0x1a0] sm:$0xff]
    %v80 = vld [vmem:[%s0 + $0x1a8] sm:$0xff]
    %v81 = vld [vmem:[%s0 + $0x1b0] sm:$0xff]
    %v82 = vld [vmem:[%s0 + $0x1b8] sm:$0xff]
    %v83 = vld [vmem:[%s0 + $0x1c0] sm:$0xff]
    %v84 = vld [vmem:[%s0 + $0x1c8] sm:$0xff]
    %v85 = vld [vmem:[%s0 + $0x1d0] sm:$0xff]
    %v86 = vld [vmem:[%s0 + $0x1d8] sm:$0xff]
    %v87 = vld [vmem:[%s0 + $0x1e0] sm:$0xff]
    %v88 = vld [vmem:[%s0 + $0x1e8] sm:$0xff]
    %v89 = vld [vmem:[%s0 + $0x1f0] sm:$0xff]
    %v90 = vld [vmem:[%s0 + $0x1f8] sm:$0xff]
    %v91 = vld [vmem:[#allocation2] sm:$0x3]
    %vm92 = vcmask 130048
    %v93 = vsel %vm92, %v27, 0.0
    %v94 = vsel %vm92, %v28, 0.0
    %v95 = vadd.f32 %v93, %v94
    %v96 = vsel %vm92, %v29, 0.0
    %v97 = vadd.f32 %v95, %v96
    %v98 = vsel %vm92, %v30, 0.0
    %v99 = vadd.f32 %v97, %v98
    %v100 = vsel %vm92, %v31, 0.0
    %v101 = vadd.f32 %v99, %v100
    %v102 = vsel %vm92, %v32, 0.0
    %v103 = vadd.f32 %v101, %v102
    %v104 = vsel %vm92, %v33, 0.0
    %v105 = vadd.f32 %v103, %v104
    %v106 = vsel %vm92, %v34, 0.0
    %v107 = vadd.f32 %v105, %v106
    %v108 = vsel %vm92, %v35, 0.0
    %v109 = vadd.f32 %v107, %v108
    %v110 = vsel %vm92, %v36, 0.0
    %v111 = vadd.f32 %v109, %v110
    %v112 = vsel %vm92, %v37, 0.0
    %v113 = vadd.f32 %v111, %v112
    %v114 = vsel %vm92, %v38, 0.0
    %v115 = vadd.f32 %v113, %v114
    %v116 = vsel %vm92, %v39, 0.0
    %v117 = vadd.f32 %v115, %v116
    %v118 = vsel %vm92, %v40, 0.0
    %v119 = vadd.f32 %v117, %v118
    %v120 = vsel %vm92, %v41, 0.0
    %v121 = vadd.f32 %v119, %v120
    %v122 = vsel %vm92, %v42, 0.0
    %v123 = vadd.f32 %v121, %v122
    %v124 = vsel %vm92, %v43, 0.0
    %v125 = vadd.f32 %v123, %v124
    %v126 = vsel %vm92, %v44, 0.0
    %v127 = vadd.f32 %v125, %v126
    %v128 = vsel %vm92, %v45, 0.0
    %v129 = vadd.f32 %v127, %v128
    %v130 = vsel %vm92, %v46, 0.0
    %v131 = vadd.f32 %v129, %v130
    %v132 = vsel %vm92, %v47, 0.0
    %v133 = vadd.f32 %v131, %v132
    %v134 = vsel %vm92, %v48, 0.0
    %v135 = vadd.f32 %v133, %v134
    %v136 = vsel %vm92, %v49, 0.0
    %v137 = vadd.f32 %v135, %v136
    %v138 = vsel %vm92, %v50, 0.0
    %v139 = vadd.f32 %v137, %v138
    %v140 = vsel %vm92, %v51, 0.0
    %v141 = vadd.f32 %v139, %v140
    %v142 = vsel %vm92, %v52, 0.0
    %v143 = vadd.f32 %v141, %v142
    %v144 = vsel %vm92, %v53, 0.0
    %v145 = vadd.f32 %v143, %v144
    %v146 = vsel %vm92, %v54, 0.0
    %v147 = vadd.f32 %v145, %v146
    %v148 = vsel %vm92, %v55, 0.0
    %v149 = vadd.f32 %v147, %v148
    %v150 = vsel %vm92, %v56, 0.0
    %v151 = vadd.f32 %v149, %v150
    %v152 = vsel %vm92, %v57, 0.0
    %v153 = vadd.f32 %v151, %v152
    %v154 = vsel %vm92, %v58, 0.0
    %v155 = vadd.f32 %v153, %v154
    %v156 = vrot.slane %v155, 4
    %v157 = vadd.f32 %v155, %v156
    %v158 = vrot.slane %v157, 2
    %v159 = vadd.f32 %v157, %v158
    %v160 = vrot.slane %v159, 1
    %v161 = vadd.f32 %v159, %v160
    %v162 = vsel %vm92, %v59, 0.0
    %v163 = vsel %vm92, %v60, 0.0
    %v164 = vadd.f32 %v162, %v163
    %v165 = vsel %vm92, %v61, 0.0
    %v166 = vadd.f32 %v164, %v165
    %v167 = vsel %vm92, %v62, 0.0
    %v168 = vadd.f32 %v166, %v167
    %v169 = vsel %vm92, %v63, 0.0
    %v170 = vadd.f32 %v168, %v169
    %v171 = vsel %vm92, %v64, 0.0
    %v172 = vadd.f32 %v170, %v171
    %v173 = vsel %vm92, %v65, 0.0
    %v174 = vadd.f32 %v172, %v173
    %v175 = vsel %vm92, %v66, 0.0
    %v176 = vadd.f32 %v174, %v175
    %v177 = vsel %vm92, %v67, 0.0
    %v178 = vadd.f32 %v176, %v177
    %v179 = vsel %vm92, %v68, 0.0
    %v180 = vadd.f32 %v178, %v179
    %v181 = vsel %vm92, %v69, 0.0
    %v182 = vadd.f32 %v180, %v181
    %v183 = vsel %vm92, %v70, 0.0
    %v184 = vadd.f32 %v182, %v183
    %v185 = vsel %vm92, %v71, 0.0
    %v186 = vadd.f32 %v184, %v185
    %v187 = vsel %vm92, %v72, 0.0
    %v188 = vadd.f32 %v186, %v187
    %v189 = vsel %vm92, %v73, 0.0
    %v190 = vadd.f32 %v188, %v189
    %v191 = vsel %vm92, %v74, 0.0
    %v192 = vadd.f32 %v190, %v191
    %v193 = vsel %vm92, %v75, 0.0
    %v194 = vadd.f32 %v192, %v193
    %v195 = vsel %vm92, %v76, 0.0
    %v196 = vadd.f32 %v194, %v195
    %v197 = vsel %vm92, %v77, 0.0
    %v198 = vadd.f32 %v196, %v197
    %v199 = vsel %vm92, %v78, 0.0
    %v200 = vadd.f32 %v198, %v199
    %v201 = vsel %vm92, %v79, 0.0
    %v202 = vadd.f32 %v200, %v201
    %v203 = vsel %vm92, %v80, 0.0
    %v204 = vadd.f32 %v202, %v203
    %v205 = vsel %vm92, %v81, 0.0
    %v206 = vadd.f32 %v204, %v205
    %v207 = vsel %vm92, %v82, 0.0
    %v208 = vadd.f32 %v206, %v207
    %v209 = vsel %vm92, %v83, 0.0
    %v210 = vadd.f32 %v208, %v209
    %v211 = vsel %vm92, %v84, 0.0
    %v212 = vadd.f32 %v210, %v211
    %v213 = vsel %vm92, %v85, 0.0
    %v214 = vadd.f32 %v212, %v213
    %v215 = vsel %vm92, %v86, 0.0
    %v216 = vadd.f32 %v214, %v215
    %v217 = vsel %vm92, %v87, 0.0
    %v218 = vadd.f32 %v216, %v217
    %v219 = vsel %vm92, %v88, 0.0
    %v220 = vadd.f32 %v218, %v219
    %v221 = vsel %vm92, %v89, 0.0
    %v222 = vadd.f32 %v220, %v221
    %v223 = vsel %vm92, %v90, 0.0
    %v224 = vadd.f32 %v222, %v223
    %v225 = vrot.slane %v224, 4
    %v226 = vadd.f32 %v224, %v225
    %v227 = vrot.slane %v226, 2
    %v228 = vadd.f32 %v226, %v227
    %v229 = vrot.slane %v228, 1
    %v230 = vadd.f32 %v228, %v229
    %vm233 = vcmask 1041409
    %v234 = vsel %vm233, %v230, %v161
    %v236 = vadd.f32 %v91, %v234
    %vm237 = vcmask 123904
    %238 = vst.msk [vmem:[#allocation2] sm:$0x3] %vm237, %v236
    // Predicated region
    $region26: #{tpu_custom_call.1} parent=1 // pred_check
      %p239 = pneg %p21
    $region27: #{tpu_custom_call.1} parent=1 // pred_check_branch
      %241 = sbr.rel (%p239) target = $region29
    $region28: #{tpu_custom_call.1} parent=1 // pred_region
      %v242 = vld [vmem:[#allocation2] sm:$0x3]
      %v243 = vmul.f32 %v242, 0.00390625
      %v244 = vld [vmem:[%s1] sm:$0xff]
      %v245 = vld [vmem:[%s1 + $0x8] sm:$0xff]
      %v246 = vld [vmem:[%s2] sm:$0x1]
      %v248 = vlaneseq
      %v249 = vshrl.u32 %v248, 7
      %v250 = vsub.s32 0, %v249
      %v251 = vrot.slane %v246, %v250
      %v254 = vsel %vm92, %v243, 0
      %256 = vmatprep.subr.mxu0 0.0
      %257 = vmatpush1.msra.mxu0 %v244
      %258 = vmatprep.subr.mxu0 0.0
      %259 = vmatpush1.msra.mxu0 %v245
      %260 = vmatprep.subr.mxu0 0.0
      %261 = vmatpush1.msra.mxu0 0.0
      %262 = vmatprep.subr.mxu0 0.0
      %263 = vmatpush1.msra.mxu0 0.0
      %264 = vmatprep.subr.mxu0 0.0
      %265 = vmatpush1.msra.mxu0 0.0
      %266 = vmatprep.subr.mxu0 0.0
      %267 = vmatpush1.msra.mxu0 0.0
      %268 = vmatprep.subr.mxu0 0.0
      %269 = vmatpush1.msra.mxu0 0.0
      %270 = vmatprep.subr.mxu0 0.0
      %271 = vmatpush1.msra.mxu0 0.0
      %272 = vmatprep.subr.mxu0 0.0
      %273 = vmatpush1.msra.mxu0 0.0
      %274 = vmatprep.subr.mxu0 0.0
      %275 = vmatpush1.msra.mxu0 0.0
      %276 = vmatprep.subr.mxu0 0.0
      %277 = vmatpush1.msra.mxu0 0.0
      %278 = vmatprep.subr.mxu0 0.0
      %279 = vmatpush1.msra.mxu0 0.0
      %280 = vmatprep.subr.mxu0 0.0
      %281 = vmatpush1.msra.mxu0 0.0
      %282 = vmatprep.subr.mxu0 0.0
      %283 = vmatpush1.msra.mxu0 0.0
      %284 = vmatprep.subr.mxu0 0.0
      %285 = vmatpush1.msra.mxu0 0.0
      %286 = vmatprep.subr.mxu0 0.0
      %287 = vmatpush1.msra.mxu0 0.0
      %288 = vmatprep.subr.mxu0 0.0
      %289 = vmatpush1.msra.mxu0 0.0
      %290 = vmatprep.subr.mxu0 0.0
      %291 = vmatpush1.msra.mxu0 0.0
      %292 = vmatprep.subr.mxu0 0.0
      %293 = vmatpush1.msra.mxu0 0.0
      %294 = vmatprep.subr.mxu0 0.0
      %295 = vmatpush1.msra.mxu0 0.0
      %296 = vmatprep.subr.mxu0 0.0
      %297 = vmatpush1.msra.mxu0 0.0
      %298 = vmatprep.subr.mxu0 0.0
      %299 = vmatpush1.msra.mxu0 0.0
      %300 = vmatprep.subr.mxu0 0.0
      %301 = vmatpush1.msra.mxu0 0.0
      %302 = vmatprep.subr.mxu0 0.0
      %303 = vmatpush1.msra.mxu0 0.0
      %304 = vmatprep.subr.mxu0 0.0
      %305 = vmatpush1.msra.mxu0 0.0
      %306 = vmatprep.subr.mxu0 0.0
      %307 = vmatpush1.msra.mxu0 0.0
      %308 = vmatprep.subr.mxu0 0.0
      %309 = vmatpush1.msra.mxu0 0.0
      %310 = vmatprep.subr.mxu0 0.0
      %311 = vmatpush1.msra.mxu0 0.0
      %312 = vmatprep.subr.mxu0 0.0
      %313 = vmatpush1.msra.mxu0 0.0
      %314 = vmatprep.subr.mxu0 0.0
      %315 = vmatpush1.msra.mxu0 0.0
      %316 = vmatprep.subr.mxu0 0.0
      %317 = vmatpush1.msra.mxu0 0.0
      %318 = vmatprep.subr.mxu0 0.0
      %319 = vmatpush1.msra.mxu0 0.0
      %320 = vmatprep.mubr.f32.mxu0 0.0
      %321 = vmatmul.mubr.f32.gmra.mrb[0].mxu0 %v254
      %v322 = vpop.f32.mrb[0].mxu0
      %v323 = vadd.f32 %v251, %v322
      %v324 = vpop.f32.mrb[0].mxu0
      %325 = vdwg.mxu0
      %v326 = vmax.f32 %v323, 0.0
      %v327 = vld [vmem:[%s3] sm:$0xf]
      %v328 = vld [vmem:[%s4] sm:$0x1]
      %v330 = vlaneseq
      %v331 = vshrl.u32 %v330, 7
      %v332 = vsub.s32 0, %v331
      %v333 = vrot.slane %v328, %v332
      %vm335 = vcmask 31744
      %v337 = vsel %vm335, %v326, 0
      %vm339 = vcmask 1043456
      %v341 = vsel %vm339, %v327, 0
      %343 = vmatprep.subr.mxu0 0.0
      %344 = vmatpush1.msra.mxu0 %v341
      %345 = vmatprep.subr.mxu0 0.0
      %346 = vmatpush1.msra.mxu0 0.0
      %347 = vmatprep.subr.mxu0 0.0
      %348 = vmatpush1.msra.mxu0 0.0
      %349 = vmatprep.subr.mxu0 0.0
      %350 = vmatpush1.msra.mxu0 0.0
      %351 = vmatprep.subr.mxu0 0.0
      %352 = vmatpush1.msra.mxu0 0.0
      %353 = vmatprep.subr.mxu0 0.0
      %354 = vmatpush1.msra.mxu0 0.0
      %355 = vmatprep.subr.mxu0 0.0
      %356 = vmatpush1.msra.mxu0 0.0
      %357 = vmatprep.subr.mxu0 0.0
      %358 = vmatpush1.msra.mxu0 0.0
      %359 = vmatprep.subr.mxu0 0.0
      %360 = vmatpush1.msra.mxu0 0.0
      %361 = vmatprep.subr.mxu0 0.0
      %362 = vmatpush1.msra.mxu0 0.0
      %363 = vmatprep.subr.mxu0 0.0
      %364 = vmatpush1.msra.mxu0 0.0
      %365 = vmatprep.subr.mxu0 0.0
      %366 = vmatpush1.msra.mxu0 0.0
      %367 = vmatprep.subr.mxu0 0.0
      %368 = vmatpush1.msra.mxu0 0.0
      %369 = vmatprep.subr.mxu0 0.0
      %370 = vmatpush1.msra.mxu0 0.0
      %371 = vmatprep.subr.mxu0 0.0
      %372 = vmatpush1.msra.mxu0 0.0
      %373 = vmatprep.subr.mxu0 0.0
      %374 = vmatpush1.msra.mxu0 0.0
      %375 = vmatprep.subr.mxu0 0.0
      %376 = vmatpush1.msra.mxu0 0.0
      %377 = vmatprep.subr.mxu0 0.0
      %378 = vmatpush1.msra.mxu0 0.0
      %379 = vmatprep.subr.mxu0 0.0
      %380 = vmatpush1.msra.mxu0 0.0
      %381 = vmatprep.subr.mxu0 0.0
      %382 = vmatpush1.msra.mxu0 0.0
      %383 = vmatprep.subr.mxu0 0.0
      %384 = vmatpush1.msra.mxu0 0.0
      %385 = vmatprep.subr.mxu0 0.0
      %386 = vmatpush1.msra.mxu0 0.0
      %387 = vmatprep.subr.mxu0 0.0
      %388 = vmatpush1.msra.mxu0 0.0
      %389 = vmatprep.subr.mxu0 0.0
      %390 = vmatpush1.msra.mxu0 0.0
      %391 = vmatprep.subr.mxu0 0.0
      %392 = vmatpush1.msra.mxu0 0.0
      %393 = vmatprep.subr.mxu0 0.0
      %394 = vmatpush1.msra.mxu0 0.0
      %395 = vmatprep.subr.mxu0 0.0
      %396 = vmatpush1.msra.mxu0 0.0
      %397 = vmatprep.subr.mxu0 0.0
      %398 = vmatpush1.msra.mxu0 0.0
      %399 = vmatprep.subr.mxu0 0.0
      %400 = vmatpush1.msra.mxu0 0.0
      %401 = vmatprep.subr.mxu0 0.0
      %402 = vmatpush1.msra.mxu0 0.0
      %403 = vmatprep.subr.mxu0 0.0
      %404 = vmatpush1.msra.mxu0 0.0
      %405 = vmatprep.subr.mxu0 0.0
      %406 = vmatpush1.msra.mxu0 0.0
      %407 = vmatprep.mubr.f32.mxu0 0.0
      %408 = vmatmul.mubr.f32.gmra.mrb[0].mxu0 %v337
      %v409 = vpop.f32.mrb[0].mxu0
      %v410 = vadd.f32 %v333, %v409
      %v411 = vpop.f32.mrb[0].mxu0
      %412 = vdwg.mxu0
      %v413 = vxor.u32 %v410, 2147483648
      %v414 = vmul.f32 %v413, 1.442695
      %v415 = vpow.pop %v414
      %v416 = vadd.f32 %v415, 1.0
      %v417 = vrcp.pop %v416
      %v418 = vmul.f32 1.0, %v417
      %419 = vst.msk [vmem:[#allocation3] sm:$0x3] %vm237, %v418
    $region29: #{tpu_custom_call.1} parent=1 // pred_fallthru
      _
    // Predicated region
    $region30: #{tpu_custom_call.1} parent=1 // pred_check
      _
    $region31: #{tpu_custom_call.1} parent=1 // pred_check_branch
      %421 = sbr.rel (0) target = $region33
    $region32: #{tpu_custom_call.1} parent=1 // pred_region
      %s423 = ssub.s32 32, 32
      %424 = vsyncadd [#allocation4], %s423
      %s426 = sshll.u32 [#allocation3], 4
      %s427 = int_to_ptr.vmem [resolvable:$true] %s426
      %429 = dma.vmem_to_hbm [thread:$0]  %s427, 32, %s5, [#allocation4]
    $region33: #{tpu_custom_call.1} parent=1 // pred_fallthru
      _
    // Predicated region
    $region34: #{tpu_custom_call.1} parent=1 // pred_check
      _
    $region35: #{tpu_custom_call.1} parent=1 // pred_check_branch
      %431 = sbr.rel (0) target = $region37
    $region36: #{tpu_custom_call.1} parent=1 // pred_region
      %432 = dma.done [#allocation4], 32
    $region37: #{tpu_custom_call.1} parent=1 // pred_fallthru
      _
    %433 = vsyncpa [#allocation4], 1

</llo_original>
